<compile_context>
chip_gen: v5e
topology: v5e:2x2
jax: 0.10.0
libtpu: 0.0.40
codegen_flags: <defaults>
</compile_context>

<pallas_src>
import jax
import jax.numpy as jnp
from jax.experimental import pallas as pl
from jax.experimental.pallas import tpu as pltpu


def _temporal_linear_kernel(x_ref, w_ref, b_ref, o_ref):
    # x_ref: (TM, H_in), w_ref: (H_in, H_out_p), b_ref: (1, H_out_p) f32,
    # o_ref: (TM, H_out_p)
    acc = jnp.dot(x_ref[...], w_ref[...], preferred_element_type=jnp.float32)
    o_ref[...] = (acc + b_ref[...]).astype(o_ref.dtype)


def _round_up(a, b):
    return ((a + b - 1) // b) * b


def temporal_layer_linear(x, weight, bias, *, tm=512):
    """Applies y = x @ weight + bias to every temporal slice.

    Args:
      x:      (T, N, H_in)
      weight: (H_in, H_out)   (transposed w.r.t. torch's (H_out, H_in))
      bias:   (H_out,)
      tm:     row tile over M = T*N; sweep 512/1024/2048 on v5e/v6e,
              keep <=1024 on v7x (64 MiB VMEM).
    Returns:
      (T, N, H_out)
    """
    t, n, h_in = x.shape
    h_out = weight.shape[1]
    m = t * n

    # --- lane-dense output: pad H_out up to a multiple of 128 -------------
    h_out_p = _round_up(h_out, 128)
    if h_out_p != h_out:
        weight = jnp.pad(weight, ((0, 0), (0, h_out_p - h_out)))
        bias = jnp.pad(bias, (0, h_out_p - h_out))

    # --- choose row tile (multiple of 8 sublanes), pad M to a whole grid --
    tm_eff = min(tm, _round_up(m, 8))
    tm_eff = _round_up(tm_eff, 8)
    m_pad = _round_up(m, tm_eff)

    x2d = x.reshape(m, h_in)                      # (T*N, H_in) contiguous
    if m_pad != m:
        x2d = jnp.pad(x2d, ((0, m_pad - m), (0, 0)))
    b2d = bias.reshape(1, h_out_p).astype(jnp.float32)   # f32 once, in wrapper

    grid_m = m_pad // tm_eff

    out2d = pl.pallas_call(
        _temporal_linear_kernel,
        out_shape=jax.ShapeDtypeStruct((m_pad, h_out_p), x.dtype),
        grid_spec=pltpu.PrefetchScalarGridSpec(
            num_scalar_prefetch=0,
            grid=(grid_m,),
            in_specs=[
                pl.BlockSpec((tm_eff, h_in), lambda i: (i, 0)),     # stream x rows
                pl.BlockSpec((h_in, h_out_p), lambda i: (0, 0)),    # resident weight
                pl.BlockSpec((1, h_out_p), lambda i: (0, 0)),       # resident bias
            ],
            out_specs=pl.BlockSpec((tm_eff, h_out_p), lambda i: (i, 0)),
        ),
        compiler_params=pltpu.CompilerParams(
            dimension_semantics=("parallel",),    # M tiles independent -> megacore
        ),
    )(x2d, weight, b2d)

    # slice off M / H_out padding, restore (T, N, H_out)
    return out2d[:m, :h_out].reshape(t, n, h_out)


if __name__ == "__main__":
    # Small shapes consistent with the module: seq T=8, batch N=4, hidden 32 -> 64
    T, N, H_IN, H_OUT = 8, 4, 32, 64

    key = jax.random.PRNGKey(0)
    kx, kw, kb = jax.random.split(key, 3)

    x = jax.random.normal(kx, (T, N, H_IN), dtype=jnp.float32)

    # Deterministic Linear-style init (uniform(-1/sqrt(H_IN), 1/sqrt(H_IN)))
    bound = 1.0 / (H_IN ** 0.5)
    weight = jax.random.uniform(kw, (H_IN, H_OUT), minval=-bound, maxval=bound,
                                dtype=jnp.float32)
    bias = jax.random.uniform(kb, (H_OUT,), minval=-bound, maxval=bound,
                              dtype=jnp.float32)

    # Use a small row tile so the demo actually exercises a multi-step grid
    # (M = 32, tm=16 -> grid=(2,)); production sizes use the default tm=512.
    out = temporal_layer_linear(x, weight, bias, tm=16)
    out = jax.block_until_ready(out)

    # Reference check against plain JAX (same semantics as the PyTorch module)
    ref = (x.reshape(T * N, H_IN) @ weight + bias).reshape(T, N, H_OUT)
    assert out.shape == (T, N, H_OUT)
    assert jnp.allclose(out, ref, atol=1e-5, rtol=1e-5)

    print("KERNEL_OK")
</pallas_src>

<mosaic_0001>
module attributes {stable_mosaic.version = 11 : i64} {
  func.func @_temporal_linear_kernel(%arg0: i32, %arg1: memref<16x32xf32, #tpu.memory_space<vmem>>, %arg2: memref<32x128xf32, #tpu.memory_space<vmem>>, %arg3: memref<1x128xf32, #tpu.memory_space<vmem>>, %arg4: memref<16x128xf32, #tpu.memory_space<vmem>>) attributes {dimension_semantics = [#tpu.dimension_semantics<parallel>], iteration_bounds = array<i64: 2>, scalar_prefetch = 0 : i64, scratch_operands = 0 : i64, tpu.core_type = #tpu.core_type<tc>, window_params = [{transform_indices = @transform_0, window_bounds = array<i64: 16, 32>}, {pipeline_mode = #tpu.pipeline_mode<synchronous>, transform_indices = @transform_1, window_bounds = array<i64: 32, 128>}, {pipeline_mode = #tpu.pipeline_mode<synchronous>, transform_indices = @transform_2, window_bounds = array<i64: 1, 128>}, {transform_indices = @transform_3, window_bounds = array<i64: 16, 128>}]} {
    %c0 = arith.constant 0 : index
    %c0_0 = arith.constant 0 : index
    %0 = vector.load %arg1[%c0, %c0_0] : memref<16x32xf32, #tpu.memory_space<vmem>>, vector<16x32xf32>
    %c0_1 = arith.constant 0 : index
    %c0_2 = arith.constant 0 : index
    %1 = vector.load %arg2[%c0_1, %c0_2] : memref<32x128xf32, #tpu.memory_space<vmem>>, vector<32x128xf32>
    %cst = arith.constant dense<0.000000e+00> : vector<16x128xf32>
    %2 = tpu.matmul %0, %1, %cst {dimension_numbers = #tpu.dot_dimension_numbers<[1], [0], [0], [1], [0, 0, 1, 1], [], []>} : vector<16x32xf32>, vector<32x128xf32>, vector<16x128xf32> -> vector<16x128xf32>
    %c0_3 = arith.constant 0 : index
    %c0_4 = arith.constant 0 : index
    %3 = vector.load %arg3[%c0_3, %c0_4] : memref<1x128xf32, #tpu.memory_space<vmem>>, vector<1x128xf32>
    %4 = vector.broadcast %3 : vector<1x128xf32> to vector<16x128xf32>
    %5 = arith.addf %2, %4 : vector<16x128xf32>
    %c0_5 = arith.constant 0 : index
    %c0_6 = arith.constant 0 : index
    %6 = vector.load %arg4[%c0_5, %c0_6] : memref<16x128xf32, #tpu.memory_space<vmem>>, vector<16x128xf32>
    tpu.vector_store %arg4[%c0_5, %c0_6], %5 {strides = array<i32>} : memref<16x128xf32, #tpu.memory_space<vmem>>, vector<16x128xf32>,
    return
  }
  func.func @transform_0(%arg0: i32) -> (i32, i32) {
    %c0_i32 = arith.constant 0 : i32
    %c0_i32_0 = arith.constant 0 : i32
    return %arg0, %c0_i32 : i32, i32
  }
  func.func @transform_1(%arg0: i32) -> (i32, i32) {
    %c0_i32 = arith.constant 0 : i32
    %c0_i32_0 = arith.constant 0 : i32
    %c0_i32_1 = arith.constant 0 : i32
    return %c0_i32, %c0_i32_0 : i32, i32
  }
  func.func @transform_2(%arg0: i32) -> (i32, i32) {
    %c0_i32 = arith.constant 0 : i32
    %c0_i32_0 = arith.constant 0 : i32
    %c0_i32_1 = arith.constant 0 : i32
    return %c0_i32, %c0_i32_0 : i32, i32
  }
  func.func @transform_3(%arg0: i32) -> (i32, i32) {
    %c0_i32 = arith.constant 0 : i32
    %c0_i32_0 = arith.constant 0 : i32
    return %arg0, %c0_i32 : i32, i32
  }
}

</mosaic_0001>

<llo_original>
// kernel: tpu_custom_call.1
$region0: #{tpu_custom_call.1}
  #allocation0 [shape = 'u32[]', space=smem, size = 0x4, offset = 0x4, fixed_abs, tag = 'smem constant byte address 0x4 - core index']
  #allocation1 [shape = 'u32[72,128]{1,0:T(1,128)}', space=vmem, size = 0x9000, scoped, tag = 'internal scratch']
  %s0 = inlined_call_operand.hbm [shape: f32[32,32], index: 0, kind: input, shape index: {}]
  %s1 = inlined_call_operand.hbm [shape: f32[32,128], index: 1, kind: input, shape index: {}]
  %s2 = inlined_call_operand.vmem [shape: f32[1,128], index: 2, kind: input, shape index: {}]
  %s3 = inlined_call_operand.hbm [shape: f32[32,128], index: 3, kind: output, shape index: {}]
  %s4 = sld [smem:[#allocation0]]
  $region53: #{tpu_custom_call.1} parent=0
    _
  %s6 = ssub.s32 1, %s4
  %s7 = scalar_select 0, %s6, %s4
  $region1: #{tpu_custom_call.1} parent=0
    #allocation2 [shape = 'u8[16384]{0}', space=vmem, size = 0x4000, scoped, tag = 'input window, operand 0']
    #allocation3 [shape = 's32[2]{0}', space=sflag, size = 0x8, scoped, tag = 'scoped memory for tpu_custom_call.1']
    #allocation4 [shape = 's32[2]{0}', space=sflag, size = 0x8, scoped, tag = 'scoped memory for tpu_custom_call.1']
    #allocation5 [shape = 'u8[16384]{0}', space=vmem, size = 0x4000, scoped, tag = 'input window, operand 1, single buffered']
    #allocation6 [shape = 's32[1]{0}', space=sflag, size = 0x4, scoped, tag = 'scoped memory for tpu_custom_call.1']
    #allocation7 [shape = 'u8[16384]{0}', space=vmem, size = 0x4000, scoped, tag = 'output window, operand 0']
    %8 = vsyncpa [#allocation3], 0
    %s9 = scalar_lea.sflag [#allocation3], 1
    %10 = vsyncpa %s9, 0
    %11 = vsyncpa [#allocation6], 0
    %12 = vsyncpa [#allocation4], 0
    %s13 = scalar_lea.sflag [#allocation4], 1
    %14 = vsyncpa %s13, 0
    loop: start=0, step=1, limit=4
    $region2: #{tpu_custom_call.1} parent=1 // loop_pre_header
      _
    $region3: #{tpu_custom_call.1} parent=1 // loop_header
      %s16 = sphi 0, %s20
      %p17 = scmp.ge.s32.totalorder %s16, 4
      %s26 = sphi 0, %s28
      %s29 = sphi 0, %s26
      %s30 = sphi 0, %s29
      %s46 = sphi 0, %s30
      %s50 = sphi 0, %s50
      %s52 = sphi 0, %s50
      %s53 = sphi 0, %s52
      %s67 = sphi 0, %s53
      %s71 = sphi 0, %s71
      %s73 = sphi 0, %s71
      %s74 = sphi 0, %s73
      %s88 = sphi 0, %s74
      %s94 = sphi 0, %s96
      %s97 = sphi 0, %s94
      %s98 = sphi 0, %s97
      %s114 = sphi 0, %s98
    $region4: #{tpu_custom_call.1} parent=1 // loop_header_branch
      %19 = sbr.rel (%p17) target = $region8
    $region5: #{tpu_custom_call.1} parent=1 // loop_body
      %s21 = ssub.s32 %s16, 1
      %s22 = ssub.s32 %s16, 2
      %s23 = sadd.s32 %s16, 1
      %s24 = ssub.s32 %s16, %s23
      %p25 = scmp.eq.s32.totalorder %s24, 0
      %s27 = sadd.s32 %s26, 1
      %s28 = scalar_select %p25, %s26, %s27
      %p31 = pneg %p25
      %p32 = scmp.eq.s32.totalorder %s16, 1
      %p33 = por %p31, %p32
      %p34 = scmp.ne.s32.totalorder %s26, %s29
      %p35 = scmp.eq.s32.totalorder %s16, 0
      %p36 = por %p34, %p35
      %p37 = scmp.ne.s32.totalorder %s26, %s29
      %p38 = scmp.eq.s32.totalorder %s21, 1
      %p39 = por %p37, %p38
      %p40 = scmp.ne.s32.totalorder %s29, %s30
      %p41 = scmp.eq.s32.totalorder %s21, 0
      %p42 = por %p40, %p41
      %p43 = scmp.ne.s32.totalorder %s29, %s30
      %p44 = scmp.eq.s32.totalorder %s22, 1
      %p45 = por %p43, %p44
      %p47 = scmp.ne.s32.totalorder %s30, %s46
      %p48 = scmp.eq.s32.totalorder %s22, 0
      %p49 = por %p47, %p48
      %s51 = sadd.s32 %s50, 1
      %p54 = scmp.eq.s32.totalorder %s16, 1
      %p55 = scmp.ne.s32.totalorder %s50, %s52
      %p56 = scmp.eq.s32.totalorder %s16, 0
      %p57 = por %p55, %p56
      %p58 = scmp.ne.s32.totalorder %s50, %s52
      %p59 = scmp.eq.s32.totalorder %s21, 1
      %p60 = por %p58, %p59
      %p61 = scmp.ne.s32.totalorder %s52, %s53
      %p62 = scmp.eq.s32.totalorder %s21, 0
      %p63 = por %p61, %p62
      %p64 = scmp.ne.s32.totalorder %s52, %s53
      %p65 = scmp.eq.s32.totalorder %s22, 1
      %p66 = por %p64, %p65
      %p68 = scmp.ne.s32.totalorder %s53, %s67
      %p69 = scmp.eq.s32.totalorder %s22, 0
      %p70 = por %p68, %p69
      %s72 = sadd.s32 %s71, 1
      %p75 = scmp.eq.s32.totalorder %s16, 1
      %p76 = scmp.ne.s32.totalorder %s71, %s73
      %p77 = scmp.eq.s32.totalorder %s16, 0
      %p78 = por %p76, %p77
      %p79 = scmp.ne.s32.totalorder %s71, %s73
      %p80 = scmp.eq.s32.totalorder %s21, 1
      %p81 = por %p79, %p80
      %p82 = scmp.ne.s32.totalorder %s73, %s74
      %p83 = scmp.eq.s32.totalorder %s21, 0
      %p84 = por %p82, %p83
      %p85 = scmp.ne.s32.totalorder %s73, %s74
      %p86 = scmp.eq.s32.totalorder %s22, 1
      %p87 = por %p85, %p86
      %p89 = scmp.ne.s32.totalorder %s74, %s88
      %p90 = scmp.eq.s32.totalorder %s22, 0
      %p91 = por %p89, %p90
      %s92 = ssub.s32 %s16, %s23
      %p93 = scmp.eq.s32.totalorder %s92, 0
      %s95 = sadd.s32 %s94, 1
      %s96 = scalar_select %p93, %s94, %s95
      %p99 = pneg %p93
      %p100 = scmp.eq.s32.totalorder %s16, 1
      %p101 = por %p99, %p100
      %p102 = scmp.ne.s32.totalorder %s94, %s97
      %p103 = scmp.eq.s32.totalorder %s16, 0
      %p104 = por %p102, %p103
      %p105 = scmp.ne.s32.totalorder %s94, %s97
      %p106 = scmp.eq.s32.totalorder %s21, 1
      %p107 = por %p105, %p106
      %p108 = scmp.ne.s32.totalorder %s97, %s98
      %p109 = scmp.eq.s32.totalorder %s21, 0
      %p110 = por %p108, %p109
      %p111 = scmp.ne.s32.totalorder %s97, %s98
      %p112 = scmp.eq.s32.totalorder %s22, 1
      %p113 = por %p111, %p112
      %p115 = scmp.ne.s32.totalorder %s98, %s114
      %p116 = scmp.eq.s32.totalorder %s22, 0
      %p117 = por %p115, %p116
      %p118 = scmp.le.s32.totalorder 1, %s16
      %p119 = scmp.lt.s32.totalorder %s16, 3
      %p120 = pnand %p118, %p119
      %p121 = pneg %p120
      // Predicated region
      $region9: #{tpu_custom_call.1} parent=5 // pred_check
        _
      $region10: #{tpu_custom_call.1} parent=5 // pred_check_branch
        %123 = sbr.rel (%p120) target = $region12
      $region11: #{tpu_custom_call.1} parent=5 // pred_region
        %s124 = ssub.s32 %s16, 1
        // Predicated region
        $region13: #{tpu_custom_call.1} parent=11 // pred_check
          %p125 = pneg %p63
        $region14: #{tpu_custom_call.1} parent=11 // pred_check_branch
          %127 = sbr.rel (%p125) target = $region16
        $region15: #{tpu_custom_call.1} parent=11 // pred_region
          %129 = vsyncadd [#allocation6], 0
          %s130 = sshll.u32 %s1, 4
          %s131 = int_to_ptr.hbm [resolvable:$true] %s130
          %s132 = sshll.u32 [#allocation5], 4
          %s133 = int_to_ptr.vmem [resolvable:$true] %s132
          %138 = dma.hbm_to_vmem [thread:$0]  %s131, 512, %s133, [#allocation6], 128, 128, 8
        $region16: #{tpu_custom_call.1} parent=11 // pred_fallthru
          _
        // Predicated region
        $region17: #{tpu_custom_call.1} parent=11 // pred_check
          %p139 = pneg %p84
        $region18: #{tpu_custom_call.1} parent=11 // pred_check_branch
          %141 = sbr.rel (%p139) target = $region20
        $region19: #{tpu_custom_call.1} parent=11 // pred_region
          _
        $region20: #{tpu_custom_call.1} parent=11 // pred_fallthru
          _
      $region12: #{tpu_custom_call.1} parent=5 // pred_fallthru
        _
      %p142 = scmp.lt.s32.totalorder %s16, 2
      // Predicated region
      $region21: #{tpu_custom_call.1} parent=5 // pred_check
        %p143 = pneg %p142
      $region22: #{tpu_custom_call.1} parent=5 // pred_check_branch
        %145 = sbr.rel (%p143) target = $region24
      $region23: #{tpu_custom_call.1} parent=5 // pred_region
        // Predicated region
        $region25: #{tpu_custom_call.1} parent=23 // pred_check
          %p146 = pneg %p36
        $region26: #{tpu_custom_call.1} parent=23 // pred_check_branch
          %148 = sbr.rel (%p146) target = $region28
        $region27: #{tpu_custom_call.1} parent=23 // pred_region
          %s149 = sand.u32 %s26, 1
          %s150 = scalar_lea.sflag [#allocation3], %s149
          %s151 = sand.u32 %s26, 1
          %s152 = smul.addr %s151, 16
          %s153 = scalar_lea.vmem [#allocation2], %s152
          %s154 = smul.u32 2, %s16
          %156 = vsyncadd %s150, 0
          %s157 = smul.addr %s154, 8
          %s158 = scalar_lea.hbm %s0, %s157
          %s159 = sshll.u32 %s158, 4
          %s160 = int_to_ptr.hbm [resolvable:$true] %s159
          %s161 = sshll.u32 %s153, 4
          %s162 = int_to_ptr.vmem [resolvable:$true] %s161
          %167 = dma.hbm_to_vmem [thread:$0]  %s160, 256, %s162, %s150, 128, 128, 8
        $region28: #{tpu_custom_call.1} parent=23 // pred_fallthru
          _
      $region24: #{tpu_custom_call.1} parent=5 // pred_fallthru
        _
      %p168 = scmp.le.s32.totalorder 1, %s16
      %p169 = scmp.lt.s32.totalorder %s16, 3
      %p170 = pnand %p168, %p169
      %p171 = pneg %p170
      // Predicated region
      $region29: #{tpu_custom_call.1} parent=5 // pred_check
        _
      $region30: #{tpu_custom_call.1} parent=5 // pred_check_branch
        %173 = sbr.rel (%p170) target = $region32
      $region31: #{tpu_custom_call.1} parent=5 // pred_region
        %s174 = ssub.s32 %s16, 1
        %s175 = sand.u32 %s29, 1
        %s176 = scalar_lea.sflag [#allocation3], %s175
        %s177 = sand.u32 %s29, 1
        %s178 = smul.addr %s177, 16
        %s179 = scalar_lea.vmem [#allocation2], %s178
        // Predicated region
        $region33: #{tpu_custom_call.1} parent=31 // pred_check
          %p180 = pneg %p42
        $region34: #{tpu_custom_call.1} parent=31 // pred_check_branch
          %182 = sbr.rel (%p180) target = $region36
        $region35: #{tpu_custom_call.1} parent=31 // pred_region
          %184 = dma.done %s176, 256
        $region36: #{tpu_custom_call.1} parent=31 // pred_fallthru
          _
        // Predicated region
        $region37: #{tpu_custom_call.1} parent=31 // pred_check
          %p185 = pneg %p63
        $region38: #{tpu_custom_call.1} parent=31 // pred_check_branch
          %187 = sbr.rel (%p185) target = $region40
        $region39: #{tpu_custom_call.1} parent=31 // pred_region
          %189 = dma.done [#allocation6], 512
        $region40: #{tpu_custom_call.1} parent=31 // pred_fallthru
          _
        %s190 = sand.u32 %s29, 1
        %s191 = scalar_lea.sflag [#allocation3], %s190
        %s192 = sand.u32 %s29, 1
        %s193 = smul.addr %s192, 16
        %s194 = scalar_lea.vmem [#allocation2], %s193
        %p195 = pneg %p42
        %p196 = pneg %p39
        %p197 = pneg %p63
        %p198 = pneg %p60
        %p199 = pneg %p84
        %p200 = pneg %p81
        %p201 = pneg %p110
        %p202 = pneg %p107
        %s203 = sand.u32 %s97, 1
        %s204 = scalar_lea.sflag [#allocation4], %s203
        %s205 = sand.u32 %s97, 1
        %s206 = smul.addr %s205, 16
        %s207 = scalar_lea.vmem [#allocation7], %s206
        %s208 = smul.u32 2, %s21
        %s209 = smul.u32 2, %s21
        %v210 = vld [vmem:[%s179] sm:$0xff]
        %v211 = vld [vmem:[%s179 + $0x8] sm:$0xff]
        %v212 = vld [vmem:[#allocation5] sm:$0xff]
        %v213 = vld [vmem:[#allocation5 + $0x8] sm:$0xff]
        %v214 = vld [vmem:[#allocation5 + $0x10] sm:$0xff]
        %v215 = vld [vmem:[#allocation5 + $0x18] sm:$0xff]
        %v216 = vld [vmem:[%s2] sm:$0x1]
        %v218 = vperm.slane %v216, 0
        %vm220 = vcmask 261120
        %v222 = vsel %vm220, %v210, 0
        %v225 = vsel %vm220, %v211, 0
        %227 = vmatpush.msra.mxu0 0.0
        %228 = vmatpush.msra.mxu0 0.0
        %229 = vmatpush.msra.mxu0 0.0
        %230 = vmatpush.msra.mxu0 0.0
        %231 = vmatpush.msra.mxu0 0.0
        %232 = vmatpush.msra.mxu0 0.0
        %233 = vmatpush.msra.mxu0 0.0
        %234 = vmatpush.msra.mxu0 0.0
        %235 = vmatpush.msra.mxu0 0.0
        %236 = vmatpush.msra.mxu0 0.0
        %237 = vmatpush.msra.mxu0 0.0
        %238 = vmatpush.msra.mxu0 0.0
        %239 = vmatpush.msra.mxu0 %v215
        %240 = vmatpush.msra.mxu0 %v214
        %241 = vmatpush.msra.mxu0 %v213
        %242 = vmatpush.msra.mxu0 %v212
        %243 = vmatmul.f32.gmra.mxu0 %v222
        %v244 = vpop.f32.mrf.mxu0
        %v245 = vadd.f32 %v218, %v244
        %246 = vmatmul.f32.gmra.mxu0 %v225
        %v247 = vpop.f32.mrf.mxu0
        %v248 = vadd.f32 %v218, %v247
        %249 = vdwg.mxu0
        %250 = vst [vmem:[%s207] sm:$0xff] %v245
        %251 = vst [vmem:[%s207 + $0x8] sm:$0xff] %v248
        %s252 = sand.u32 %s97, 1
        %s253 = scalar_lea.sflag [#allocation4], %s252
        %s254 = sand.u32 %s97, 1
        %s255 = smul.addr %s254, 16
        %s256 = scalar_lea.vmem [#allocation7], %s255
        // Predicated region
        $region41: #{tpu_custom_call.1} parent=31 // pred_check
          %p257 = pneg %p107
        $region42: #{tpu_custom_call.1} parent=31 // pred_check_branch
          %259 = sbr.rel (%p257) target = $region44
        $region43: #{tpu_custom_call.1} parent=31 // pred_region
          %s260 = smul.u32 2, %s21
          %262 = vsyncadd %s253, 0
          %s263 = smul.addr %s260, 8
          %s264 = scalar_lea.hbm %s3, %s263
          %s265 = sshll.u32 %s256, 4
          %s266 = int_to_ptr.vmem [resolvable:$true] %s265
          %s267 = sshll.u32 %s264, 4
          %s268 = int_to_ptr.hbm [resolvable:$true] %s267
          %273 = dma.vmem_to_hbm [thread:$0]  %s266, 256, %s268, %s253, 128, 128, 8
        $region44: #{tpu_custom_call.1} parent=31 // pred_fallthru
          _
      $region32: #{tpu_custom_call.1} parent=5 // pred_fallthru
        _
      %p274 = scmp.le.s32.totalorder 2, %s16
      // Predicated region
      $region45: #{tpu_custom_call.1} parent=5 // pred_check
        %p275 = pneg %p274
      $region46: #{tpu_custom_call.1} parent=5 // pred_check_branch
        %277 = sbr.rel (%p275) target = $region48
      $region47: #{tpu_custom_call.1} parent=5 // pred_region
        %s278 = ssub.s32 %s16, 2
        // Predicated region
        $region49: #{tpu_custom_call.1} parent=47 // pred_check
          %p279 = pneg %p113
        $region50: #{tpu_custom_call.1} parent=47 // pred_check_branch
          %281 = sbr.rel (%p279) target = $region52
        $region51: #{tpu_custom_call.1} parent=47 // pred_region
          %s282 = sand.u32 %s98, 1
          %s283 = scalar_lea.sflag [#allocation4], %s282
          %s284 = sand.u32 %s98, 1
          %s285 = smul.addr %s284, 16
          %s286 = scalar_lea.vmem [#allocation7], %s285
          %288 = dma.done %s283, 256
        $region52: #{tpu_custom_call.1} parent=47 // pred_fallthru
          _
      $region48: #{tpu_custom_call.1} parent=5 // pred_fallthru
        _
    $region6: #{tpu_custom_call.1} parent=1 // loop_footer
      %s20 = sadd.s32 1, %s16
    $region7: #{tpu_custom_call.1} parent=1 // loop_footer_branch
      %15 = sbr.rel target = $region3
    $region8: #{tpu_custom_call.1} parent=1 // loop_exit
      _
    %289 = vsyncpa [#allocation3], 1
    %s290 = scalar_lea.sflag [#allocation3], 1
    %291 = vsyncpa %s290, 1
    %292 = vsyncpa [#allocation6], 1
    %293 = vsyncpa [#allocation4], 1
    %s294 = scalar_lea.sflag [#allocation4], 1
    %295 = vsyncpa %s294, 1

</llo_original>
